<compile_context>
chip_gen: v7x
topology: tpu7x:2x2x1
jax: 0.10.0
libtpu: 0.0.40
codegen_flags: <defaults>
</compile_context>

<pallas_src>
import jax
import jax.numpy as jnp
from jax.experimental import pallas as pl
from jax.experimental.pallas import tpu as pltpu


def _mish_kernel(x_ref, o_ref):
    x = x_ref[...].astype(jnp.float32)
    # Single exp per element; clamp so t*t never overflows f32
    # (x <= 20 -> t <= 4.9e8, num <= 2.4e17).
    t = jnp.exp(jnp.minimum(x, 20.0))
    num = t * (t + 2.0)                      # (1+t)^2 - 1
    den = num + 2.0                          # (1+t)^2 + 1
    r = pl.reciprocal(den, approx=True)      # EUP vrcp (cheap slot)
    if jnp.dtype(o_ref.dtype).itemsize >= 4:
        # One Newton step on the VPU -> ~f32-accurate reciprocal.
        # Skipped for bf16/f16 outputs: ~12-bit approx already exceeds their mantissa.
        r = r * (2.0 - den * r)
    o_ref[...] = (x * num * r).astype(o_ref.dtype)


def _mish_jnp(x):
    """Plain-JAX fallback for tiny ragged tails (< 128 elements)."""
    xf = x.astype(jnp.float32)
    return (xf * jnp.tanh(jax.nn.softplus(xf))).astype(x.dtype)


def _default_block_bytes():
    """Per-generation block size: 4 MiB on v6e/v7x, 2 MiB elsewhere (v5e etc.)."""
    try:
        kind = jax.devices()[0].device_kind.lower()
    except Exception:
        return 2 * 1024 * 1024
    if ("v6" in kind) or ("v7" in kind):
        return 4 * 1024 * 1024   # 4 bufs x 4 MiB = 16 MiB, fits 32 MiB scoped default
    return 2 * 1024 * 1024       # v5e: 16 MiB scoped default -> stay at 2 MiB


def _mish_2d(x2d, target_block_bytes, donate_input):
    rows, lane = x2d.shape
    itemsize = jnp.dtype(x2d.dtype).itemsize

    # Block rows: ~target bytes per buffer, sublane-aligned (16 for sub-32-bit dtypes).
    row_align = 16 if itemsize < 4 else 8
    tile_rows = max(row_align,
                    (target_block_bytes // (lane * itemsize)) // row_align * row_align)
    if tile_rows >= rows:
        tile_rows = rows  # full-extent block is always legal
    num_blocks = pl.cdiv(rows, tile_rows)  # ragged last row-block handled by Pallas

    n = rows * lane
    cost = pl.CostEstimate(flops=12 * n,
                           transcendentals=2 * n,
                           bytes_accessed=2 * n * itemsize)

    extra = {}
    if donate_input:
        extra["input_output_aliases"] = {0: 0}

    return pl.pallas_call(
        _mish_kernel,
        out_shape=jax.ShapeDtypeStruct((rows, lane), x2d.dtype),
        grid_spec=pltpu.PrefetchScalarGridSpec(
            num_scalar_prefetch=0,
            grid=(num_blocks,),
            in_specs=[pl.BlockSpec((tile_rows, lane), lambda i: (i, 0))],
            out_specs=pl.BlockSpec((tile_rows, lane), lambda i: (i, 0)),
        ),
        compiler_params=pltpu.CompilerParams(
            dimension_semantics=("parallel",),  # independent row-blocks
        ),
        cost_estimate=cost,
        **extra,
    )(x2d)


def mish(x, *, target_block_bytes=None, donate_input=False):
    """Elementwise Mish. Accepts any shape/dtype; computes in f32 inside the kernel."""
    orig_shape = x.shape
    n = x.size
    if n == 0:
        return x

    if target_block_bytes is None:
        target_block_bytes = _default_block_bytes()

    # --- choose a wide, lane-dense last dim that divides n ------------------
    lane = 0
    for cand in (8192, 4096, 2048, 1024, 512, 256, 128):
        if n % cand == 0:
            lane = cand
            break

    x_flat = jnp.reshape(x, (-1,))

    if lane == 0:
        # Ragged size (n % 128 != 0): kernel on the 128-aligned prefix,
        # < 128-element tail in plain jnp.  No pad/slice round-trip.
        lane = 128
        main = (n // lane) * lane
        if main == 0:
            return jnp.reshape(_mish_jnp(x_flat), orig_shape)
        head2d = _mish_2d(jnp.reshape(x_flat[:main], (main // lane, lane)),
                          target_block_bytes, donate_input=False)
        tail = _mish_jnp(x_flat[main:])
        out_flat = jnp.concatenate([jnp.reshape(head2d, (-1,)), tail])
        return jnp.reshape(out_flat, orig_shape)

    rows = n // lane
    x2d = jnp.reshape(x_flat, (rows, lane))
    out2d = _mish_2d(x2d, target_block_bytes, donate_input)
    return jnp.reshape(out2d, orig_shape)


def _mish_ref(x):
    xf = x.astype(jnp.float32)
    return xf * jnp.tanh(jax.nn.softplus(xf))


if __name__ == "__main__":
    key = jax.random.PRNGKey(0)

    # NCHW input, small shape consistent with a conv-net activation.
    x = jax.random.normal(key, (2, 4, 16, 16), dtype=jnp.float32) * 3.0
    y = jax.block_until_ready(mish(x))
    assert y.shape == x.shape and y.dtype == x.dtype
    assert jnp.allclose(y, _mish_ref(x).astype(x.dtype), atol=1e-5, rtol=1e-4), \
        "mismatch vs reference (f32)"

    # bf16 path: exercises the Newton-skip branch.
    x_bf = (jax.random.normal(jax.random.PRNGKey(2), (2, 4, 16, 16)) * 3.0
            ).astype(jnp.bfloat16)
    y_bf = jax.block_until_ready(mish(x_bf))
    assert y_bf.dtype == jnp.bfloat16 and y_bf.shape == x_bf.shape
    assert jnp.allclose(y_bf.astype(jnp.float32),
                        _mish_ref(x_bf.astype(jnp.float32)),
                        atol=3e-2, rtol=3e-2), "mismatch vs reference (bf16)"

    # Ragged size exercising the kernel-prefix + jnp-tail path (903 = 7*128 + 7).
    x_rag = jax.random.normal(jax.random.PRNGKey(1), (7, 129), dtype=jnp.float32) * 3.0
    y_rag = jax.block_until_ready(mish(x_rag))
    assert y_rag.shape == x_rag.shape
    assert jnp.allclose(y_rag, _mish_ref(x_rag).astype(x_rag.dtype),
                        atol=1e-5, rtol=1e-4), "mismatch vs reference (ragged)"

    # Tiny ragged input (< 128 elements) falls back to plain jnp.
    x_odd = jax.random.normal(jax.random.PRNGKey(3), (3, 5, 7), dtype=jnp.float32) * 3.0
    y_odd = jax.block_until_ready(mish(x_odd))
    assert y_odd.shape == x_odd.shape
    assert jnp.allclose(y_odd, _mish_ref(x_odd).astype(x_odd.dtype),
                        atol=1e-5, rtol=1e-4), "mismatch vs reference (tiny)"

    print("KERNEL_OK")
</pallas_src>

<mosaic_0001>
module attributes {stable_mosaic.version = 11 : i64} {
  func.func @_mish_kernel(%arg0: i32, %arg1: memref<1x2048xf32, #tpu.memory_space<vmem>>, %arg2: memref<1x2048xf32, #tpu.memory_space<vmem>>) attributes {dimension_semantics = [#tpu.dimension_semantics<parallel>], iteration_bounds = array<i64: 1>, scalar_prefetch = 0 : i64, scratch_operands = 0 : i64, tpu.core_type = #tpu.core_type<tc>, window_params = [{transform_indices = @transform_0, window_bounds = array<i64: 1, 2048>}, {transform_indices = @transform_1, window_bounds = array<i64: 1, 2048>}]} {
    %c0 = arith.constant 0 : index
    %c0_0 = arith.constant 0 : index
    %0 = vector.load %arg1[%c0, %c0_0] : memref<1x2048xf32, #tpu.memory_space<vmem>>, vector<1x2048xf32>
    %cst = arith.constant 2.000000e+01 : f32
    %1 = vector.broadcast %cst : f32 to vector<1x2048xf32>
    %2 = arith.minimumf %0, %1 : vector<1x2048xf32>
    %3 = math.exp %2 : vector<1x2048xf32>
    %cst_1 = arith.constant 2.000000e+00 : f32
    %4 = vector.broadcast %cst_1 : f32 to vector<1x2048xf32>
    %5 = arith.addf %3, %4 : vector<1x2048xf32>
    %6 = arith.mulf %3, %5 : vector<1x2048xf32>
    %cst_2 = arith.constant 2.000000e+00 : f32
    %7 = vector.broadcast %cst_2 : f32 to vector<1x2048xf32>
    %8 = arith.addf %6, %7 : vector<1x2048xf32>
    %9 = tpu.reciprocal %8 {approx = true} : vector<1x2048xf32> -> vector<1x2048xf32>
    %10 = arith.mulf %8, %9 : vector<1x2048xf32>
    %cst_3 = arith.constant 2.000000e+00 : f32
    %11 = vector.broadcast %cst_3 : f32 to vector<1x2048xf32>
    %12 = arith.subf %11, %10 : vector<1x2048xf32>
    %13 = arith.mulf %9, %12 : vector<1x2048xf32>
    %14 = arith.mulf %0, %6 : vector<1x2048xf32>
    %15 = arith.mulf %14, %13 : vector<1x2048xf32>
    %c0_4 = arith.constant 0 : index
    %c0_5 = arith.constant 0 : index
    %16 = vector.load %arg2[%c0_4, %c0_5] : memref<1x2048xf32, #tpu.memory_space<vmem>>, vector<1x2048xf32>
    tpu.vector_store %arg2[%c0_4, %c0_5], %15 {strides = array<i32>} : memref<1x2048xf32, #tpu.memory_space<vmem>>, vector<1x2048xf32>,
    return
  }
  func.func @transform_0(%arg0: i32) -> (i32, i32) {
    %c0_i32 = arith.constant 0 : i32
    %c0_i32_0 = arith.constant 0 : i32
    return %arg0, %c0_i32 : i32, i32
  }
  func.func @transform_1(%arg0: i32) -> (i32, i32) {
    %c0_i32 = arith.constant 0 : i32
    %c0_i32_0 = arith.constant 0 : i32
    return %arg0, %c0_i32 : i32, i32
  }
}

</mosaic_0001>

<llo_original>
// kernel: tpu_custom_call.1
$region0: #{tpu_custom_call.1}
  #allocation0 [shape = 'u32[]', space=smem, size = 0x4, offset = 0x4, fixed_abs, tag = 'smem constant byte address 0x4 - core index']
  #allocation1 [shape = 'u32[144,128]{1,0:T(1,128)}', space=vmem, size = 0x12000, scoped, tag = 'internal scratch']
  %s0 = inlined_call_operand.hbm [shape: f32[1,2048], index: 0, kind: input, shape index: {}]
  %s1 = inlined_call_operand.hbm [shape: f32[1,2048], index: 1, kind: output, shape index: {}]
  %s2 = sld [smem:[#allocation0]]
  $region18: #{tpu_custom_call.1} parent=0
    _
  %s4 = ssub.s32 1, %s2
  %s5 = scalar_select 0, %s4, %s2
  $region1: #{tpu_custom_call.1} parent=0
    #allocation2 [shape = 'u8[8192]{0}', space=vmem, size = 0x2000, scoped, tag = 'input window, operand 0, single buffered']
    #allocation3 [shape = 's32[1]{0}', space=sflag, size = 0x4, scoped, tag = 'scoped memory for tpu_custom_call.1']
    #allocation4 [shape = 's32[1]{0}', space=sflag, size = 0x4, scoped, tag = 'scoped memory for tpu_custom_call.1']
    #allocation5 [shape = 'u8[8192]{0}', space=vmem, size = 0x2000, scoped, tag = 'output window, operand 0, single buffered']
    %6 = vsyncpa [#allocation3], 0
    %7 = vsyncpa [#allocation4], 0
    // Predicated region
    $region2: #{tpu_custom_call.1} parent=1 // pred_check
      _
    $region3: #{tpu_custom_call.1} parent=1 // pred_check_branch
      %9 = sbr.rel (0) target = $region5
    $region4: #{tpu_custom_call.1} parent=1 // pred_region
      %s11 = ssub.s32 256, 256
      %12 = vsyncadd [#allocation3], %s11
      %s14 = sshll.u32 [#allocation2], 4
      %s15 = int_to_ptr.vmem [resolvable:$true] %s14
      %17 = dma.hbm_to_vmem [thread:$0]  %s0, 256, %s15, [#allocation3]
    $region5: #{tpu_custom_call.1} parent=1 // pred_fallthru
      _
    // Predicated region
    $region6: #{tpu_custom_call.1} parent=1 // pred_check
      _
    $region7: #{tpu_custom_call.1} parent=1 // pred_check_branch
      %19 = sbr.rel (0) target = $region9
    $region8: #{tpu_custom_call.1} parent=1 // pred_region
      %20 = dma.done [#allocation3], 256
    $region9: #{tpu_custom_call.1} parent=1 // pred_fallthru
      _
    %v21 = vld [vmem:[#allocation2] sm:$0xff]
    %v22 = vld [vmem:[#allocation2 + $0x8] sm:$0xff]
    %v23 = vmin.f32 %v21, 20.0
    %v24 = vmin.f32 %v22, 20.0
    %v25 = vmul.f32 %v23, 1.442695
    %v26 = vpow.pop %v25
    %v27 = vmul.f32 %v24, 1.442695
    %v28 = vpow.pop %v27
    %v29 = vadd.f32 %v26, 2.0
    %v30 = vadd.f32 %v28, 2.0
    %v31 = vmul.f32 %v26, %v29
    %v32 = vmul.f32 %v28, %v30
    %v33 = vadd.f32 %v31, 2.0
    %v34 = vadd.f32 %v32, 2.0
    %v35 = vrcp.pop %v33
    %v36 = vrcp.pop %v34
    %v37 = vmul.f32 %v33, %v35
    %v38 = vmul.f32 %v34, %v36
    %v39 = vsub.f32 2.0, %v37
    %v40 = vsub.f32 2.0, %v38
    %v41 = vmul.f32 %v35, %v39
    %v42 = vmul.f32 %v36, %v40
    %v43 = vmul.f32 %v21, %v31
    %v44 = vmul.f32 %v22, %v32
    %v45 = vmul.f32 %v43, %v41
    %v46 = vmul.f32 %v44, %v42
    %47 = vst [vmem:[#allocation5] sm:$0xff] %v45
    %48 = vst [vmem:[#allocation5 + $0x8] sm:$0xff] %v46
    // Predicated region
    $region10: #{tpu_custom_call.1} parent=1 // pred_check
      _
    $region11: #{tpu_custom_call.1} parent=1 // pred_check_branch
      %50 = sbr.rel (0) target = $region13
    $region12: #{tpu_custom_call.1} parent=1 // pred_region
      %s52 = ssub.s32 256, 256
      %53 = vsyncadd [#allocation4], %s52
      %s55 = sshll.u32 [#allocation5], 4
      %s56 = int_to_ptr.vmem [resolvable:$true] %s55
      %58 = dma.vmem_to_hbm [thread:$0]  %s56, 256, %s1, [#allocation4]
    $region13: #{tpu_custom_call.1} parent=1 // pred_fallthru
      _
    // Predicated region
    $region14: #{tpu_custom_call.1} parent=1 // pred_check
      _
    $region15: #{tpu_custom_call.1} parent=1 // pred_check_branch
      %60 = sbr.rel (0) target = $region17
    $region16: #{tpu_custom_call.1} parent=1 // pred_region
      %61 = dma.done [#allocation4], 256
    $region17: #{tpu_custom_call.1} parent=1 // pred_fallthru
      _
    %62 = vsyncpa [#allocation3], 1
    %63 = vsyncpa [#allocation4], 1

</llo_original>
